<compile_context>
chip_gen: v7x
topology: tpu7x:2x2x1
jax: 0.10.0
libtpu: 0.0.40
codegen_flags: <defaults>
</compile_context>

<pallas_src>
import jax
import jax.numpy as jnp
from jax.experimental import pallas as pl
from jax.experimental.pallas import tpu as pltpu


def _round_up(x, m):
    return ((x + m - 1) // m) * m


def adversary_kernel(z_ref, w1_ref, w23_ref, w4_ref, b_ref, out_ref):
    # z_ref:   (TILE_M, d_in)        compute dtype (bf16)
    # w1_ref:  (d_in, H)             compute dtype
    # w23_ref: (2, H, H)             compute dtype  (w2 = [0], w3 = [1])
    # w4_ref:  (H, n_sensitive)      compute dtype
    # b_ref:   (4, H) float32        (row 3 holds b4 in its first n_sensitive lanes)
    # out_ref: (TILE_M, n_sensitive) float32
    n_sens = out_ref.shape[-1]
    cdt = z_ref.dtype

    z = z_ref[...]

    h = jnp.dot(z, w1_ref[...], preferred_element_type=jnp.float32) + b_ref[0:1, :]
    h = jnp.maximum(h, 0.0).astype(cdt)

    h = jnp.dot(h, w23_ref[0], preferred_element_type=jnp.float32) + b_ref[1:2, :]
    h = jnp.maximum(h, 0.0).astype(cdt)

    h = jnp.dot(h, w23_ref[1], preferred_element_type=jnp.float32) + b_ref[2:3, :]
    h = jnp.maximum(h, 0.0).astype(cdt)

    h = jnp.dot(h, w4_ref[...], preferred_element_type=jnp.float32) + b_ref[3:4, :n_sens]

    out_ref[...] = h.astype(out_ref.dtype)


def adversary_forward(Z, params, *, compute_dtype=jnp.bfloat16, tile_m=512):
    """Z: (N, d_in). params: dict with w1..w4 (in,out) and b1..b4 (1,out) in float32."""
    N, d_in = Z.shape
    n_hidden = params["w1"].shape[1]
    n_sensitive = params["w4"].shape[1]

    # Tile rows: large enough to amortize per-step overhead, small enough for VMEM;
    # always a multiple of 8 (sublane constraint).
    tile_m = min(tile_m, _round_up(max(N, 8), 8))
    tile_m = _round_up(tile_m, 8)
    n_pad = _round_up(N, tile_m)

    # Cast once in the wrapper (not per-tile in the kernel).
    z = Z.astype(compute_dtype)
    if n_pad != N:
        z = jnp.pad(z, ((0, n_pad - N), (0, 0)))

    w1 = params["w1"].astype(compute_dtype)
    w23 = jnp.stack([params["w2"], params["w3"]], axis=0).astype(compute_dtype)
    w4 = params["w4"].astype(compute_dtype)

    # Pack the four biases into one (4, H) f32 array (b4 zero-padded on the lane axis).
    b = jnp.zeros((4, n_hidden), jnp.float32)
    b = b.at[0, :].set(params["b1"].reshape(-1))
    b = b.at[1, :].set(params["b2"].reshape(-1))
    b = b.at[2, :].set(params["b3"].reshape(-1))
    b = b.at[3, :n_sensitive].set(params["b4"].reshape(-1))

    grid = (n_pad // tile_m,)

    out = pl.pallas_call(
        adversary_kernel,
        out_shape=jax.ShapeDtypeStruct((n_pad, n_sensitive), jnp.float32),
        grid_spec=pl.GridSpec(
            grid=grid,
            in_specs=[
                pl.BlockSpec((tile_m, d_in), lambda i: (i, 0)),          # Z: streamed per tile
                pl.BlockSpec((d_in, n_hidden), lambda i: (0, 0)),        # w1: VMEM-resident
                pl.BlockSpec((2, n_hidden, n_hidden), lambda i: (0, 0, 0)),  # w2+w3
                pl.BlockSpec((n_hidden, n_sensitive), lambda i: (0, 0)),     # w4
                pl.BlockSpec((4, n_hidden), lambda i: (0, 0)),               # packed biases
            ],
            out_specs=pl.BlockSpec((tile_m, n_sensitive), lambda i: (i, 0)),
        ),
        compiler_params=pltpu.CompilerParams(
            dimension_semantics=("parallel",),
        ),
    )(z, w1, w23, w4, b)

    return out[:N]


def init_params(key, d_in, n_hidden, n_sensitive):
    ks = jax.random.split(key, 8)

    def lin(kw, kb, fan_in, fan_out):
        # PyTorch-Linear-like uniform init: U(-1/sqrt(fan_in), 1/sqrt(fan_in))
        bound = 1.0 / jnp.sqrt(fan_in)
        w = jax.random.uniform(kw, (fan_in, fan_out), jnp.float32, -bound, bound)
        b = jax.random.uniform(kb, (1, fan_out), jnp.float32, -bound, bound)
        return w, b

    w1, b1 = lin(ks[0], ks[1], d_in, n_hidden)
    w2, b2 = lin(ks[2], ks[3], n_hidden, n_hidden)
    w3, b3 = lin(ks[4], ks[5], n_hidden, n_hidden)
    w4, b4 = lin(ks[6], ks[7], n_hidden, n_sensitive)
    return {"w1": w1, "b1": b1, "w2": w2, "b2": b2,
            "w3": w3, "b3": b3, "w4": w4, "b4": b4}


def reference_forward(Z, p, compute_dtype=jnp.bfloat16):
    """Pure-JAX reference with the same dtype discipline as the kernel
    (bf16 inputs, f32 accumulation + bias, re-cast between layers)."""
    z = Z.astype(compute_dtype)
    w1 = p["w1"].astype(compute_dtype)
    w2 = p["w2"].astype(compute_dtype)
    w3 = p["w3"].astype(compute_dtype)
    w4 = p["w4"].astype(compute_dtype)

    h = jnp.dot(z, w1, preferred_element_type=jnp.float32) + p["b1"]
    h = jnp.maximum(h, 0.0).astype(compute_dtype)
    h = jnp.dot(h, w2, preferred_element_type=jnp.float32) + p["b2"]
    h = jnp.maximum(h, 0.0).astype(compute_dtype)
    h = jnp.dot(h, w3, preferred_element_type=jnp.float32) + p["b3"]
    h = jnp.maximum(h, 0.0).astype(compute_dtype)
    return jnp.dot(h, w4, preferred_element_type=jnp.float32) + p["b4"]


if __name__ == "__main__":
    # args.hidden2_dim1 (encoder latent dim) -> 16; n_hidden=32; n_sensitive=4.
    # NOTE: hidden=32 / out=4 occupy <=32 of 128 lanes -> structural padding; widening
    # n_hidden to 128 would make the MXU/store path lane-dense if hyperparams allow.
    batch, d_in, n_hidden, n_sensitive = 8, 16, 32, 4

    key = jax.random.PRNGKey(0)
    k_z, k_p = jax.random.split(key)
    Z = jax.random.normal(k_z, (batch, d_in), jnp.float32)
    params = init_params(k_p, d_in, n_hidden, n_sensitive)

    out = adversary_forward(Z, params)
    out = jax.block_until_ready(out)

    ref = reference_forward(Z, params)
    assert out.shape == (batch, n_sensitive)
    assert jnp.allclose(out, ref, atol=1e-2, rtol=1e-2), "mismatch vs JAX reference"

    print("KERNEL_OK")
</pallas_src>

<mosaic_0001>
module attributes {stable_mosaic.version = 11 : i64} {
  func.func @adversary_kernel(%arg0: i32, %arg1: memref<8x16xbf16, #tpu.memory_space<vmem>>, %arg2: memref<16x32xbf16, #tpu.memory_space<vmem>>, %arg3: memref<2x32x32xbf16, #tpu.memory_space<vmem>>, %arg4: memref<32x4xbf16, #tpu.memory_space<vmem>>, %arg5: memref<4x32xf32, #tpu.memory_space<vmem>>, %arg6: memref<8x4xf32, #tpu.memory_space<vmem>>) attributes {dimension_semantics = [#tpu.dimension_semantics<parallel>], iteration_bounds = array<i64: 1>, scalar_prefetch = 0 : i64, scratch_operands = 0 : i64, tpu.core_type = #tpu.core_type<tc>, window_params = [{transform_indices = @transform_0, window_bounds = array<i64: 8, 16>}, {pipeline_mode = #tpu.pipeline_mode<synchronous>, transform_indices = @transform_1, window_bounds = array<i64: 16, 32>}, {pipeline_mode = #tpu.pipeline_mode<synchronous>, transform_indices = @transform_2, window_bounds = array<i64: 2, 32, 32>}, {pipeline_mode = #tpu.pipeline_mode<synchronous>, transform_indices = @transform_3, window_bounds = array<i64: 32, 4>}, {pipeline_mode = #tpu.pipeline_mode<synchronous>, transform_indices = @transform_4, window_bounds = array<i64: 4, 32>}, {transform_indices = @transform_5, window_bounds = array<i64: 8, 4>}]} {
    %c0 = arith.constant 0 : index
    %c0_0 = arith.constant 0 : index
    %0 = vector.load %arg1[%c0, %c0_0] : memref<8x16xbf16, #tpu.memory_space<vmem>>, vector<8x16xbf16>
    %c0_1 = arith.constant 0 : index
    %c0_2 = arith.constant 0 : index
    %1 = vector.load %arg2[%c0_1, %c0_2] : memref<16x32xbf16, #tpu.memory_space<vmem>>, vector<16x32xbf16>
    %cst = arith.constant dense<0.000000e+00> : vector<8x32xf32>
    %2 = tpu.matmul %0, %1, %cst {dimension_numbers = #tpu.dot_dimension_numbers<[1], [0], [0], [1], [0, 0, 1, 1], [], []>} : vector<8x16xbf16>, vector<16x32xbf16>, vector<8x32xf32> -> vector<8x32xf32>
    %c0_3 = arith.constant 0 : index
    %c0_4 = arith.constant 0 : index
    %3 = vector.load %arg5[%c0_3, %c0_4] : memref<4x32xf32, #tpu.memory_space<vmem>>, vector<1x32xf32>
    %4 = vector.broadcast %3 : vector<1x32xf32> to vector<8x32xf32>
    %5 = arith.addf %2, %4 : vector<8x32xf32>
    %cst_5 = arith.constant 0.000000e+00 : f32
    %6 = vector.broadcast %cst_5 : f32 to vector<8x32xf32>
    %7 = arith.maximumf %5, %6 : vector<8x32xf32>
    %8 = arith.truncf %7 : vector<8x32xf32> to vector<8x32xbf16>
    %c0_6 = arith.constant 0 : index
    %c0_7 = arith.constant 0 : index
    %c0_8 = arith.constant 0 : index
    %9 = vector.load %arg3[%c0_6, %c0_7, %c0_8] : memref<2x32x32xbf16, #tpu.memory_space<vmem>>, vector<1x32x32xbf16>
    %10 = vector.shape_cast %9 : vector<1x32x32xbf16> to vector<32x32xbf16>
    %cst_9 = arith.constant dense<0.000000e+00> : vector<8x32xf32>
    %11 = tpu.matmul %8, %10, %cst_9 {dimension_numbers = #tpu.dot_dimension_numbers<[1], [0], [0], [1], [0, 0, 1, 1], [], []>} : vector<8x32xbf16>, vector<32x32xbf16>, vector<8x32xf32> -> vector<8x32xf32>
    %c1 = arith.constant 1 : index
    %c0_10 = arith.constant 0 : index
    %12 = vector.load %arg5[%c1, %c0_10] : memref<4x32xf32, #tpu.memory_space<vmem>>, vector<1x32xf32>
    %13 = vector.broadcast %12 : vector<1x32xf32> to vector<8x32xf32>
    %14 = arith.addf %11, %13 : vector<8x32xf32>
    %cst_11 = arith.constant 0.000000e+00 : f32
    %15 = vector.broadcast %cst_11 : f32 to vector<8x32xf32>
    %16 = arith.maximumf %14, %15 : vector<8x32xf32>
    %17 = arith.truncf %16 : vector<8x32xf32> to vector<8x32xbf16>
    %c1_12 = arith.constant 1 : index
    %c0_13 = arith.constant 0 : index
    %c0_14 = arith.constant 0 : index
    %18 = vector.load %arg3[%c1_12, %c0_13, %c0_14] : memref<2x32x32xbf16, #tpu.memory_space<vmem>>, vector<1x32x32xbf16>
    %19 = vector.shape_cast %18 : vector<1x32x32xbf16> to vector<32x32xbf16>
    %cst_15 = arith.constant dense<0.000000e+00> : vector<8x32xf32>
    %20 = tpu.matmul %17, %19, %cst_15 {dimension_numbers = #tpu.dot_dimension_numbers<[1], [0], [0], [1], [0, 0, 1, 1], [], []>} : vector<8x32xbf16>, vector<32x32xbf16>, vector<8x32xf32> -> vector<8x32xf32>
    %c2 = arith.constant 2 : index
    %c0_16 = arith.constant 0 : index
    %21 = vector.load %arg5[%c2, %c0_16] : memref<4x32xf32, #tpu.memory_space<vmem>>, vector<1x32xf32>
    %22 = vector.broadcast %21 : vector<1x32xf32> to vector<8x32xf32>
    %23 = arith.addf %20, %22 : vector<8x32xf32>
    %cst_17 = arith.constant 0.000000e+00 : f32
    %24 = vector.broadcast %cst_17 : f32 to vector<8x32xf32>
    %25 = arith.maximumf %23, %24 : vector<8x32xf32>
    %26 = arith.truncf %25 : vector<8x32xf32> to vector<8x32xbf16>
    %c0_18 = arith.constant 0 : index
    %c0_19 = arith.constant 0 : index
    %27 = vector.load %arg4[%c0_18, %c0_19] : memref<32x4xbf16, #tpu.memory_space<vmem>>, vector<32x4xbf16>
    %cst_20 = arith.constant dense<0.000000e+00> : vector<8x4xf32>
    %28 = tpu.matmul %26, %27, %cst_20 {dimension_numbers = #tpu.dot_dimension_numbers<[1], [0], [0], [1], [0, 0, 1, 1], [], []>} : vector<8x32xbf16>, vector<32x4xbf16>, vector<8x4xf32> -> vector<8x4xf32>
    %c3 = arith.constant 3 : index
    %c0_21 = arith.constant 0 : index
    %29 = vector.load %arg5[%c3, %c0_21] : memref<4x32xf32, #tpu.memory_space<vmem>>, vector<1x4xf32>
    %30 = vector.broadcast %29 : vector<1x4xf32> to vector<8x4xf32>
    %31 = arith.addf %28, %30 : vector<8x4xf32>
    %c0_22 = arith.constant 0 : index
    %c0_23 = arith.constant 0 : index
    %32 = vector.load %arg6[%c0_22, %c0_23] : memref<8x4xf32, #tpu.memory_space<vmem>>, vector<8x4xf32>
    tpu.vector_store %arg6[%c0_22, %c0_23], %31 {strides = array<i32>} : memref<8x4xf32, #tpu.memory_space<vmem>>, vector<8x4xf32>,
    return
  }
  func.func @transform_0(%arg0: i32) -> (i32, i32) {
    %c0_i32 = arith.constant 0 : i32
    %c0_i32_0 = arith.constant 0 : i32
    return %arg0, %c0_i32 : i32, i32
  }
  func.func @transform_1(%arg0: i32) -> (i32, i32) {
    %c0_i32 = arith.constant 0 : i32
    %c0_i32_0 = arith.constant 0 : i32
    %c0_i32_1 = arith.constant 0 : i32
    return %c0_i32, %c0_i32_0 : i32, i32
  }
  func.func @transform_2(%arg0: i32) -> (i32, i32, i32) {
    %c0_i32 = arith.constant 0 : i32
    %c0_i32_0 = arith.constant 0 : i32
    %c0_i32_1 = arith.constant 0 : i32
    %c0_i32_2 = arith.constant 0 : i32
    return %c0_i32, %c0_i32_0, %c0_i32_1 : i32, i32, i32
  }
  func.func @transform_3(%arg0: i32) -> (i32, i32) {
    %c0_i32 = arith.constant 0 : i32
    %c0_i32_0 = arith.constant 0 : i32
    %c0_i32_1 = arith.constant 0 : i32
    return %c0_i32, %c0_i32_0 : i32, i32
  }
  func.func @transform_4(%arg0: i32) -> (i32, i32) {
    %c0_i32 = arith.constant 0 : i32
    %c0_i32_0 = arith.constant 0 : i32
    %c0_i32_1 = arith.constant 0 : i32
    return %c0_i32, %c0_i32_0 : i32, i32
  }
  func.func @transform_5(%arg0: i32) -> (i32, i32) {
    %c0_i32 = arith.constant 0 : i32
    %c0_i32_0 = arith.constant 0 : i32
    return %arg0, %c0_i32 : i32, i32
  }
}

</mosaic_0001>

<llo_original>
// kernel: tpu_custom_call.1
$region0: #{tpu_custom_call.1}
  #allocation0 [shape = 'u32[]', space=smem, size = 0x4, offset = 0x4, fixed_abs, tag = 'smem constant byte address 0x4 - core index']
  #allocation1 [shape = 'u32[144,128]{1,0:T(1,128)}', space=vmem, size = 0x12000, scoped, tag = 'internal scratch']
  %s0 = inlined_call_operand.vmem [shape: bf16[8,16], index: 0, kind: input, shape index: {}]
  %s1 = inlined_call_operand.vmem [shape: bf16[16,32], index: 1, kind: input, shape index: {}]
  %s2 = inlined_call_operand.hbm [shape: bf16[2,32,32], index: 2, kind: input, shape index: {}]
  %s3 = inlined_call_operand.vmem [shape: bf16[32,4], index: 3, kind: input, shape index: {}]
  %s4 = inlined_call_operand.vmem [shape: f32[4,32], index: 4, kind: input, shape index: {}]
  %s5 = inlined_call_operand.vmem [shape: f32[8,4], index: 5, kind: output, shape index: {}]
  %s6 = sld [smem:[#allocation0]]
  $region34: #{tpu_custom_call.1} parent=0
    _
  %s8 = ssub.s32 1, %s6
  %s9 = scalar_select 0, %s8, %s6
  $region1: #{tpu_custom_call.1} parent=0
    #allocation2 [shape = 'u8[16384]{0}', space=vmem, size = 0x4000, scoped, tag = 'input window, operand 2, single buffered']
    #allocation3 [shape = 's32[1]{0}', space=sflag, size = 0x4, scoped, tag = 'scoped memory for tpu_custom_call.1']
    %10 = vsyncpa [#allocation3], 0
    // Predicated region
    $region2: #{tpu_custom_call.1} parent=1 // pred_check
      _
    $region3: #{tpu_custom_call.1} parent=1 // pred_check_branch
      %12 = sbr.rel (0) target = $region5
    $region4: #{tpu_custom_call.1} parent=1 // pred_region
      _
    $region5: #{tpu_custom_call.1} parent=1 // pred_fallthru
      _
    // Predicated region
    $region6: #{tpu_custom_call.1} parent=1 // pred_check
      _
    $region7: #{tpu_custom_call.1} parent=1 // pred_check_branch
      %14 = sbr.rel (0) target = $region9
    $region8: #{tpu_custom_call.1} parent=1 // pred_region
      _
    $region9: #{tpu_custom_call.1} parent=1 // pred_fallthru
      _
    // Predicated region
    $region10: #{tpu_custom_call.1} parent=1 // pred_check
      _
    $region11: #{tpu_custom_call.1} parent=1 // pred_check_branch
      %16 = sbr.rel (0) target = $region13
    $region12: #{tpu_custom_call.1} parent=1 // pred_region
      %s18 = ssub.s32 512, 512
      %19 = vsyncadd [#allocation3], %s18
      %s20 = sshll.u32 [#allocation2], 4
      %s21 = int_to_ptr.vmem [resolvable:$true] %s20
      %26 = dma.hbm_to_vmem [thread:$0]  %s2, 512, %s21, [#allocation3], 64, 64, 4
    $region13: #{tpu_custom_call.1} parent=1 // pred_fallthru
      _
    // Predicated region
    $region14: #{tpu_custom_call.1} parent=1 // pred_check
      _
    $region15: #{tpu_custom_call.1} parent=1 // pred_check_branch
      %28 = sbr.rel (0) target = $region17
    $region16: #{tpu_custom_call.1} parent=1 // pred_region
      _
    $region17: #{tpu_custom_call.1} parent=1 // pred_fallthru
      _
    // Predicated region
    $region18: #{tpu_custom_call.1} parent=1 // pred_check
      _
    $region19: #{tpu_custom_call.1} parent=1 // pred_check_branch
      %30 = sbr.rel (0) target = $region21
    $region20: #{tpu_custom_call.1} parent=1 // pred_region
      _
    $region21: #{tpu_custom_call.1} parent=1 // pred_fallthru
      _
    // Predicated region
    $region22: #{tpu_custom_call.1} parent=1 // pred_check
      _
    $region23: #{tpu_custom_call.1} parent=1 // pred_check_branch
      %32 = sbr.rel (0) target = $region25
    $region24: #{tpu_custom_call.1} parent=1 // pred_region
      %33 = dma.done [#allocation3], 512
    $region25: #{tpu_custom_call.1} parent=1 // pred_fallthru
      _
    %v35 = vld [vmem:[%s0] sm:$0xf]
    %v36 = vld [vmem:[%s1] sm:$0xf]
    %v37 = vld [vmem:[%s1 + $0x4] sm:$0xf]
    %v38 = vld [vmem:[%s4] sm:$0x1]
    %v39 = vlaneseq
    %v40 = vshrl.u32 %v39, 7
    %v41 = vsub.s32 0, %v40
    %v42 = vrot.slane %v38, %v41
    %v45 = vunpack.c.l.b16 %v36
    %v46 = vunpack.c.l.b16 %v37
    %v47 = vpack.c.b16 %v46, %v45
    %vm49 = vcmask 130048
    %v51 = vsel %vm49, %v35, 0
    %53 = vmatprep.subr.bf16.mxu0 0
    %54 = vmatpush1.bf16.msra.mxu0 %v47
    %55 = vmatprep.subr.bf16.mxu0 0
    %56 = vmatpush1.bf16.msra.mxu0 0
    %57 = vmatprep.subr.bf16.mxu0 0
    %58 = vmatpush1.bf16.msra.mxu0 0
    %59 = vmatprep.subr.bf16.mxu0 0
    %60 = vmatpush1.bf16.msra.mxu0 0
    %61 = vmatprep.subr.bf16.mxu0 0
    %62 = vmatpush1.bf16.msra.mxu0 0
    %63 = vmatprep.subr.bf16.mxu0 0
    %64 = vmatpush1.bf16.msra.mxu0 0
    %65 = vmatprep.subr.bf16.mxu0 0
    %66 = vmatpush1.bf16.msra.mxu0 0
    %67 = vmatprep.subr.bf16.mxu0 0
    %68 = vmatpush1.bf16.msra.mxu0 0
    %69 = vmatprep.subr.bf16.mxu0 0
    %70 = vmatpush1.bf16.msra.mxu0 0
    %71 = vmatprep.subr.bf16.mxu0 0
    %72 = vmatpush1.bf16.msra.mxu0 0
    %73 = vmatprep.subr.bf16.mxu0 0
    %74 = vmatpush1.bf16.msra.mxu0 0
    %75 = vmatprep.subr.bf16.mxu0 0
    %76 = vmatpush1.bf16.msra.mxu0 0
    %77 = vmatprep.subr.bf16.mxu0 0
    %78 = vmatpush1.bf16.msra.mxu0 0
    %79 = vmatprep.subr.bf16.mxu0 0
    %80 = vmatpush1.bf16.msra.mxu0 0
    %81 = vmatprep.subr.bf16.mxu0 0
    %82 = vmatpush1.bf16.msra.mxu0 0
    %83 = vmatprep.subr.bf16.mxu0 0
    %84 = vmatpush1.bf16.msra.mxu0 0
    %85 = vmatprep.mubr.bf16.mxu0 0
    %86 = vmatmul.mubr.bf16.gmra.mrb[0].mxu0 %v51
    %v87 = vpop.f32.mrb[0].mxu0
    %v88 = vadd.f32 %v42, %v87
    %v89 = vpop.f32.mrb[0].mxu0
    %v90 = vpop.f32.mrb[0].mxu0
    %v91 = vpop.f32.mrb[0].mxu0
    %92 = vdwg.mxu0
    %v93 = vmax.f32 %v88, 0.0
    %v94 = vpack.c.bf16 %v93, %v93
    %v95 = vld [vmem:[#allocation2] sm:$0xf]
    %v96 = vld [vmem:[#allocation2 + $0x4] sm:$0xf]
    %v97 = vld [vmem:[#allocation2 + $0x8] sm:$0xf]
    %v98 = vld [vmem:[#allocation2 + $0xc] sm:$0xf]
    %v99 = vld [vmem:[%s4 + $0x1] sm:$0x1]
    %v100 = vlaneseq
    %v101 = vshrl.u32 %v100, 7
    %v102 = vsub.s32 0, %v101
    %v103 = vrot.slane %v99, %v102
    %v108 = vunpack.c.l.b16 %v95
    %v109 = vunpack.c.l.b16 %v96
    %v110 = vunpack.c.l.b16 %v97
    %v111 = vunpack.c.l.b16 %v98
    %v112 = vpack.c.b16 %v109, %v108
    %v113 = vpack.c.b16 %v111, %v110
    %vm116 = vcmask 261120
    %v118 = vsel %vm116, %v94, 0
    %120 = vmatprep.subr.bf16.mxu0 0
    %121 = vmatpush1.bf16.msra.mxu0 %v112
    %122 = vmatprep.subr.bf16.mxu0 0
    %123 = vmatpush1.bf16.msra.mxu0 %v113
    %124 = vmatprep.subr.bf16.mxu0 0
    %125 = vmatpush1.bf16.msra.mxu0 0
    %126 = vmatprep.subr.bf16.mxu0 0
    %127 = vmatpush1.bf16.msra.mxu0 0
    %128 = vmatprep.subr.bf16.mxu0 0
    %129 = vmatpush1.bf16.msra.mxu0 0
    %130 = vmatprep.subr.bf16.mxu0 0
    %131 = vmatpush1.bf16.msra.mxu0 0
    %132 = vmatprep.subr.bf16.mxu0 0
    %133 = vmatpush1.bf16.msra.mxu0 0
    %134 = vmatprep.subr.bf16.mxu0 0
    %135 = vmatpush1.bf16.msra.mxu0 0
    %136 = vmatprep.subr.bf16.mxu0 0
    %137 = vmatpush1.bf16.msra.mxu0 0
    %138 = vmatprep.subr.bf16.mxu0 0
    %139 = vmatpush1.bf16.msra.mxu0 0
    %140 = vmatprep.subr.bf16.mxu0 0
    %141 = vmatpush1.bf16.msra.mxu0 0
    %142 = vmatprep.subr.bf16.mxu0 0
    %143 = vmatpush1.bf16.msra.mxu0 0
    %144 = vmatprep.subr.bf16.mxu0 0
    %145 = vmatpush1.bf16.msra.mxu0 0
    %146 = vmatprep.subr.bf16.mxu0 0
    %147 = vmatpush1.bf16.msra.mxu0 0
    %148 = vmatprep.subr.bf16.mxu0 0
    %149 = vmatpush1.bf16.msra.mxu0 0
    %150 = vmatprep.subr.bf16.mxu0 0
    %151 = vmatpush1.bf16.msra.mxu0 0
    %152 = vmatprep.mubr.bf16.mxu0 0
    %153 = vmatmul.mubr.bf16.gmra.mrb[0].mxu0 %v118
    %v154 = vpop.f32.mrb[0].mxu0
    %v155 = vadd.f32 %v103, %v154
    %v156 = vpop.f32.mrb[0].mxu0
    %v157 = vpop.f32.mrb[0].mxu0
    %v158 = vpop.f32.mrb[0].mxu0
    %159 = vdwg.mxu0
    %v160 = vmax.f32 %v155, 0.0
    %v161 = vpack.c.bf16 %v160, %v160
    %s162 = scalar_lea.vmem [#allocation2], 16
    %v163 = vld [vmem:[%s162] sm:$0xf]
    %v164 = vld [vmem:[%s162 + $0x4] sm:$0xf]
    %v165 = vld [vmem:[%s162 + $0x8] sm:$0xf]
    %v166 = vld [vmem:[%s162 + $0xc] sm:$0xf]
    %v167 = vld [vmem:[%s4 + $0x2] sm:$0x1]
    %v168 = vlaneseq
    %v169 = vshrl.u32 %v168, 7
    %v170 = vsub.s32 0, %v169
    %v171 = vrot.slane %v167, %v170
    %v176 = vunpack.c.l.b16 %v163
    %v177 = vunpack.c.l.b16 %v164
    %v178 = vunpack.c.l.b16 %v165
    %v179 = vunpack.c.l.b16 %v166
    %v180 = vpack.c.b16 %v177, %v176
    %v181 = vpack.c.b16 %v179, %v178
    %v185 = vsel %vm116, %v161, 0
    %187 = vmatprep.subr.bf16.mxu0 0
    %188 = vmatpush1.bf16.msra.mxu0 %v180
    %189 = vmatprep.subr.bf16.mxu0 0
    %190 = vmatpush1.bf16.msra.mxu0 %v181
    %191 = vmatprep.subr.bf16.mxu0 0
    %192 = vmatpush1.bf16.msra.mxu0 0
    %193 = vmatprep.subr.bf16.mxu0 0
    %194 = vmatpush1.bf16.msra.mxu0 0
    %195 = vmatprep.subr.bf16.mxu0 0
    %196 = vmatpush1.bf16.msra.mxu0 0
    %197 = vmatprep.subr.bf16.mxu0 0
    %198 = vmatpush1.bf16.msra.mxu0 0
    %199 = vmatprep.subr.bf16.mxu0 0
    %200 = vmatpush1.bf16.msra.mxu0 0
    %201 = vmatprep.subr.bf16.mxu0 0
    %202 = vmatpush1.bf16.msra.mxu0 0
    %203 = vmatprep.subr.bf16.mxu0 0
    %204 = vmatpush1.bf16.msra.mxu0 0
    %205 = vmatprep.subr.bf16.mxu0 0
    %206 = vmatpush1.bf16.msra.mxu0 0
    %207 = vmatprep.subr.bf16.mxu0 0
    %208 = vmatpush1.bf16.msra.mxu0 0
    %209 = vmatprep.subr.bf16.mxu0 0
    %210 = vmatpush1.bf16.msra.mxu0 0
    %211 = vmatprep.subr.bf16.mxu0 0
    %212 = vmatpush1.bf16.msra.mxu0 0
    %213 = vmatprep.subr.bf16.mxu0 0
    %214 = vmatpush1.bf16.msra.mxu0 0
    %215 = vmatprep.subr.bf16.mxu0 0
    %216 = vmatpush1.bf16.msra.mxu0 0
    %217 = vmatprep.subr.bf16.mxu0 0
    %218 = vmatpush1.bf16.msra.mxu0 0
    %219 = vmatprep.mubr.bf16.mxu0 0
    %220 = vmatmul.mubr.bf16.gmra.mrb[0].mxu0 %v185
    %v221 = vpop.f32.mrb[0].mxu0
    %v222 = vadd.f32 %v171, %v221
    %v223 = vpop.f32.mrb[0].mxu0
    %v224 = vpop.f32.mrb[0].mxu0
    %v225 = vpop.f32.mrb[0].mxu0
    %226 = vdwg.mxu0
    %v227 = vmax.f32 %v222, 0.0
    %v228 = vpack.c.bf16 %v227, %v227
    %v229 = vld [vmem:[%s3] sm:$0xf]
    %v230 = vld [vmem:[%s3 + $0x4] sm:$0xf]
    %v231 = vld [vmem:[%s3 + $0x8] sm:$0xf]
    %v232 = vld [vmem:[%s3 + $0xc] sm:$0xf]
    %v233 = vld [vmem:[%s4 + $0x3] sm:$0x1]
    %v234 = vlaneseq
    %v235 = vshrl.u32 %v234, 7
    %v236 = vsub.s32 0, %v235
    %v237 = vrot.slane %v233, %v236
    %v242 = vunpack.c.l.b16 %v229
    %v243 = vunpack.c.l.b16 %v230
    %v244 = vunpack.c.l.b16 %v231
    %v245 = vunpack.c.l.b16 %v232
    %v246 = vpack.c.b16 %v243, %v242
    %v247 = vpack.c.b16 %v245, %v244
    %v251 = vsel %vm116, %v228, 0
    %253 = vmatprep.subr.bf16.mxu0 0
    %254 = vmatpush1.bf16.msra.mxu0 %v246
    %255 = vmatprep.subr.bf16.mxu0 0
    %256 = vmatpush1.bf16.msra.mxu0 %v247
    %257 = vmatprep.subr.bf16.mxu0 0
    %258 = vmatpush1.bf16.msra.mxu0 0
    %259 = vmatprep.subr.bf16.mxu0 0
    %260 = vmatpush1.bf16.msra.mxu0 0
    %261 = vmatprep.subr.bf16.mxu0 0
    %262 = vmatpush1.bf16.msra.mxu0 0
    %263 = vmatprep.subr.bf16.mxu0 0
    %264 = vmatpush1.bf16.msra.mxu0 0
    %265 = vmatprep.subr.bf16.mxu0 0
    %266 = vmatpush1.bf16.msra.mxu0 0
    %267 = vmatprep.subr.bf16.mxu0 0
    %268 = vmatpush1.bf16.msra.mxu0 0
    %269 = vmatprep.subr.bf16.mxu0 0
    %270 = vmatpush1.bf16.msra.mxu0 0
    %271 = vmatprep.subr.bf16.mxu0 0
    %272 = vmatpush1.bf16.msra.mxu0 0
    %273 = vmatprep.subr.bf16.mxu0 0
    %274 = vmatpush1.bf16.msra.mxu0 0
    %275 = vmatprep.subr.bf16.mxu0 0
    %276 = vmatpush1.bf16.msra.mxu0 0
    %277 = vmatprep.subr.bf16.mxu0 0
    %278 = vmatpush1.bf16.msra.mxu0 0
    %279 = vmatprep.subr.bf16.mxu0 0
    %280 = vmatpush1.bf16.msra.mxu0 0
    %281 = vmatprep.subr.bf16.mxu0 0
    %282 = vmatpush1.bf16.msra.mxu0 0
    %283 = vmatprep.subr.bf16.mxu0 0
    %284 = vmatpush1.bf16.msra.mxu0 0
    %285 = vmatprep.mubr.bf16.mxu0 0
    %286 = vmatmul.mubr.bf16.gmra.mrb[0].mxu0 %v251
    %v287 = vpop.f32.mrb[0].mxu0
    %v288 = vadd.f32 %v237, %v287
    %v289 = vpop.f32.mrb[0].mxu0
    %v290 = vpop.f32.mrb[0].mxu0
    %v291 = vpop.f32.mrb[0].mxu0
    %292 = vdwg.mxu0
    %vm293 = vcmask 31744
    %294 = vst.msk [vmem:[%s5] sm:$0xff] %vm293, %v288
    // Predicated region
    $region26: #{tpu_custom_call.1} parent=1 // pred_check
      _
    $region27: #{tpu_custom_call.1} parent=1 // pred_check_branch
      %296 = sbr.rel (0) target = $region29
    $region28: #{tpu_custom_call.1} parent=1 // pred_region
      _
    $region29: #{tpu_custom_call.1} parent=1 // pred_fallthru
      _
    // Predicated region
    $region30: #{tpu_custom_call.1} parent=1 // pred_check
      _
    $region31: #{tpu_custom_call.1} parent=1 // pred_check_branch
      %298 = sbr.rel (0) target = $region33
    $region32: #{tpu_custom_call.1} parent=1 // pred_region
      _
    $region33: #{tpu_custom_call.1} parent=1 // pred_fallthru
      _
    %299 = vsyncpa [#allocation3], 1

</llo_original>
